<compile_context>
chip_gen: v7x
topology: tpu7x:2x2x1
jax: 0.10.0
libtpu: 0.0.40
codegen_flags: <defaults>
</compile_context>

<pallas_src>
import functools

import jax
import jax.numpy as jnp
from jax import lax
from jax.experimental import pallas as pl
from jax.experimental.pallas import tpu as pltpu

NDIMS = 3
HIDDEN = 128
BN_EPS = 1e-5


def _round_up(a, b):
    return (a + b - 1) // b * b


# ----------------------------------------------------------------------------
# In-kernel building blocks (shared by the stats and apply passes so the math
# is bit-identical between the passes).
# ----------------------------------------------------------------------------
def _pre_bn1(x_ref, w1_ref):
    """Linear(ndims, 128) WITHOUT bias (cancelled by BN1 mean subtraction).

    K = ndims is tiny, so this stays off the MXU: ndims rank-1 broadcast FMAs
    on the VPU.  x block: (tile_n, ndims), w1: (ndims, 128).
    """
    x = x_ref[...]
    w1 = w1_ref[...]
    h = x[:, 0:1] * w1[0:1, :]
    for k in range(1, w1.shape[0]):
        h = h + x[:, k:k + 1] * w1[k:k + 1, :]
    return h                                            # (tile_n, 128) f32


def _pre_bn2(x_ref, w1_ref, s1_ref, t1_ref, w2_ref):
    """Recompute layer-1, apply fused BN1 scale/shift + ReLU, then layer-2 on
    the MXU (bf16 weights by default, f32 accumulate).  Bias b2 dropped
    (cancelled by BN2)."""
    h = _pre_bn1(x_ref, w1_ref)
    h = jnp.maximum(h * s1_ref[...] + t1_ref[...], 0.0)
    return jnp.dot(h.astype(w2_ref.dtype), w2_ref[...],
                   preferred_element_type=jnp.float32)  # (tile_n, 128) f32


def _accum_stats(h, stats_ref, *, n_valid, tile_n):
    """Accumulate per-feature sum / sum-of-squares into the resident (2,128)
    output block.  Rows past the global batch size (last partial tile) are
    masked out; the divisor applied later is the global batch size."""
    i = pl.program_id(0)

    @pl.when(i == 0)
    def _():
        stats_ref[...] = jnp.zeros_like(stats_ref)

    if n_valid % tile_n != 0:                            # static check
        row = i * tile_n + lax.broadcasted_iota(jnp.int32, (tile_n, 1), 0)
        h = jnp.where(row < n_valid, h, 0.0)

    stats_ref[0:1, :] += jnp.sum(h, axis=0, keepdims=True)
    stats_ref[1:2, :] += jnp.sum(h * h, axis=0, keepdims=True)


# ----------------------------------------------------------------------------
# Kernels
# ----------------------------------------------------------------------------
def _bn1_stats_kernel(x_ref, w1_ref, stats_ref, *, n_valid, tile_n):
    _accum_stats(_pre_bn1(x_ref, w1_ref), stats_ref,
                 n_valid=n_valid, tile_n=tile_n)


def _bn2_stats_kernel(x_ref, w1_ref, s1_ref, t1_ref, w2_ref, stats_ref, *,
                      n_valid, tile_n):
    _accum_stats(_pre_bn2(x_ref, w1_ref, s1_ref, t1_ref, w2_ref), stats_ref,
                 n_valid=n_valid, tile_n=tile_n)


def _apply_kernel(x_ref, w1_ref, s1_ref, t1_ref, w2_ref, s2_ref, t2_ref,
                  w3_ref, b3_ref, o_ref):
    h = _pre_bn2(x_ref, w1_ref, s1_ref, t1_ref, w2_ref)
    h = jnp.maximum(h * s2_ref[...] + t2_ref[...], 0.0)
    # Layer 3: contract the last dims (trans-B matmul) so the per-row logit
    # lands on the LANE axis -> lane-dense (1, tile_n) output block, dense
    # stores and dense output DMA (b3 kept: no BN follows this layer).
    logits = lax.dot_general(
        w3_ref[...], h,
        dimension_numbers=(((1,), (1,)), ((), ())),
        preferred_element_type=jnp.float32) + b3_ref[...]   # (1, tile_n)
    o_ref[...] = jax.nn.sigmoid(logits)                      # EUP


# ----------------------------------------------------------------------------
# Host-side finalize (tiny 128-wide math between pallas_calls).
# ----------------------------------------------------------------------------
def _finalize_bn(stats, gamma, beta, n):
    """stats = [sum; sum_sq] over the GLOBAL batch -> fused scale / shift."""
    mean = stats[0] / n
    var = jnp.maximum(stats[1] / n - mean * mean, 0.0)       # biased, clamp
    scale = gamma * lax.rsqrt(var + BN_EPS)
    shift = beta - mean * scale
    return scale.reshape(1, -1), shift.reshape(1, -1)


# ----------------------------------------------------------------------------
# Wrapper
# ----------------------------------------------------------------------------
def discriminator_forward(x, params, *, layer2_bf16=True, block_rows=1024):
    """x: (N, ndims) float32 -> (N,) float32.

    layer2_bf16=True (default, recommended on v5e/v6e/v7x alike) runs the
    128x128 layer-2 matmul in bf16 on the MXU with f32 accumulation; BN math
    stays f32.  block_rows is the batch tile size (rounded as needed).
    """
    n, ndims = x.shape
    hidden = params["w1"].shape[1]

    tile_n = min(block_rows, _round_up(n, 8))
    n_pad = _round_up(n, tile_n)
    num_tiles = n_pad // tile_n
    if n_pad != n:
        x = jnp.pad(x, ((0, n_pad - n), (0, 0)))   # zero rows, masked in stats

    w1 = params["w1"]
    w2 = params["w2"].astype(jnp.bfloat16) if layer2_bf16 else params["w2"]
    w3_row = params["w3"].reshape(1, hidden)        # (128,1) -> (1,128)
    b3 = params["b3"].reshape(1, 1)

    # x block stays (tile_n, ndims); its VMEM tile is lane-padded but the HBM
    # traffic is only 4*ndims bytes/row and hides under the pipeline.
    # TODO(synk): pass x transposed (ndims, N) for lane-dense x DMA if profiled.
    x_spec = pl.BlockSpec((tile_n, ndims), lambda i: (i, 0))
    const2d = lambda a: pl.BlockSpec(a.shape, lambda i: (0, 0))  # resident

    stats_spec = pl.BlockSpec((2, hidden), lambda i: (0, 0))     # accumulator
    stats_shape = jax.ShapeDtypeStruct((2, hidden), jnp.float32)

    arbitrary = pltpu.CompilerParams(dimension_semantics=("arbitrary",))
    parallel = pltpu.CompilerParams(dimension_semantics=("parallel",))

    # --- Pass 1: BN1 batch statistics over x @ W1.
    stats1 = pl.pallas_call(
        functools.partial(_bn1_stats_kernel, n_valid=n, tile_n=tile_n),
        grid=(num_tiles,),
        in_specs=[x_spec, const2d(w1)],
        out_specs=stats_spec,
        out_shape=stats_shape,
        compiler_params=arbitrary,
    )(x, w1)
    s1, t1 = _finalize_bn(stats1, params["g1"], params["be1"], n)

    # --- Pass 2: BN2 batch statistics (recompute layer-1/BN1/ReLU/layer-2).
    stats2 = pl.pallas_call(
        functools.partial(_bn2_stats_kernel, n_valid=n, tile_n=tile_n),
        grid=(num_tiles,),
        in_specs=[x_spec, const2d(w1), const2d(s1), const2d(t1), const2d(w2)],
        out_specs=stats_spec,
        out_shape=stats_shape,
        compiler_params=arbitrary,
    )(x, w1, s1, t1, w2)
    s2, t2 = _finalize_bn(stats2, params["g2"], params["be2"], n)

    # --- Pass 3: apply.  Tiles independent -> "parallel" (v7x megacore).
    out = pl.pallas_call(
        _apply_kernel,
        grid=(num_tiles,),
        in_specs=[x_spec, const2d(w1), const2d(s1), const2d(t1),
                  const2d(w2), const2d(s2), const2d(t2),
                  const2d(w3_row), const2d(b3)],
        out_specs=pl.BlockSpec((1, tile_n), lambda i: (i, 0)),
        out_shape=jax.ShapeDtypeStruct((num_tiles, tile_n), jnp.float32),
        compiler_params=parallel,
    )(x, w1, s1, t1, w2, s2, t2, w3_row, b3)

    # matches .view(-1, 1).squeeze(1)
    return out.reshape(-1)[:n]


# ----------------------------------------------------------------------------
# Params / reference
# ----------------------------------------------------------------------------
def init_params(key, ndims=NDIMS, hidden=HIDDEN):
    """Deterministic parameter init (PyTorch Linear-style uniform bounds)."""
    ks = jax.random.split(key, 6)

    def lin(kw, kb, fan_in, fan_out):
        bound = 1.0 / float(fan_in) ** 0.5
        w = jax.random.uniform(kw, (fan_in, fan_out), jnp.float32, -bound, bound)
        b = jax.random.uniform(kb, (fan_out,), jnp.float32, -bound, bound)
        return w, b

    w1, b1 = lin(ks[0], ks[1], ndims, hidden)
    w2, b2 = lin(ks[2], ks[3], hidden, hidden)
    w3, b3 = lin(ks[4], ks[5], hidden, 1)

    return {
        "w1": w1, "b1": b1,
        "g1": jnp.ones((hidden,), jnp.float32), "be1": jnp.zeros((hidden,), jnp.float32),
        "w2": w2, "b2": b2,
        "g2": jnp.ones((hidden,), jnp.float32), "be2": jnp.zeros((hidden,), jnp.float32),
        "w3": w3, "b3": b3,
    }


def reference_forward(x, p):
    """Pure-JAX reference with the literal PyTorch math (incl. b1/b2 biases)."""
    h = x @ p["w1"] + p["b1"]
    h = (h - h.mean(0)) / jnp.sqrt(h.var(0) + BN_EPS) * p["g1"] + p["be1"]
    h = jnp.maximum(h, 0.0)
    h = h @ p["w2"] + p["b2"]
    h = (h - h.mean(0)) / jnp.sqrt(h.var(0) + BN_EPS) * p["g2"] + p["be2"]
    h = jnp.maximum(h, 0.0)
    return jax.nn.sigmoid(h @ p["w3"] + p["b3"]).reshape(-1)


if __name__ == "__main__":
    key = jax.random.PRNGKey(0)
    k_x, k_p = jax.random.split(key)
    params = init_params(k_p)

    # Multi-tile case: batch not a multiple of the tile -> exercises padding,
    # stats masking, global-N divisor and the lane-dense tiled output.
    batch = 300
    x = jax.random.normal(k_x, (batch, NDIMS), jnp.float32)
    ref = reference_forward(x, params)

    # f32 layer-2 path: tight tolerance (also validates dropped b1/b2, one-pass
    # variance and cross-tile stat accumulation).
    out_f32 = jax.block_until_ready(
        discriminator_forward(x, params, layer2_bf16=False, block_rows=128))
    assert out_f32.shape == (batch,)
    assert jnp.allclose(out_f32, ref, atol=1e-3, rtol=1e-3)

    # Default path: bf16 layer-2 on the MXU (looser tolerance, bf16 mantissa).
    out_bf16 = jax.block_until_ready(
        discriminator_forward(x, params, block_rows=128))
    assert out_bf16.shape == (batch,)
    assert jnp.allclose(out_bf16, ref, atol=5e-2, rtol=5e-2)

    # Single-tile tiny batch (the grid collapses to one step).
    x_small = jax.random.normal(k_x, (8, NDIMS), jnp.float32)
    ref_small = reference_forward(x_small, params)
    out_small = jax.block_until_ready(
        discriminator_forward(x_small, params, layer2_bf16=False))
    assert out_small.shape == (8,)
    assert jnp.allclose(out_small, ref_small, atol=1e-3, rtol=1e-3)

    print("KERNEL_OK")
</pallas_src>

<mosaic_0001>
module attributes {stable_mosaic.version = 11 : i64} {
  func.func @_bn1_stats_kernel(%arg0: i32, %arg1: memref<128x3xf32, #tpu.memory_space<vmem>>, %arg2: memref<3x128xf32, #tpu.memory_space<vmem>>, %arg3: memref<2x128xf32, #tpu.memory_space<vmem>>) attributes {dimension_semantics = [#tpu.dimension_semantics<arbitrary>], iteration_bounds = array<i64: 3>, scalar_prefetch = 0 : i64, scratch_operands = 0 : i64, tpu.core_type = #tpu.core_type<tc>, window_params = [{transform_indices = @transform_0, window_bounds = array<i64: 128, 3>}, {pipeline_mode = #tpu.pipeline_mode<synchronous>, transform_indices = @transform_1, window_bounds = array<i64: 3, 128>}, {pipeline_mode = #tpu.pipeline_mode<synchronous>, transform_indices = @transform_2, window_bounds = array<i64: 2, 128>}]} {
    %c0 = arith.constant 0 : index
    %c0_0 = arith.constant 0 : index
    %0 = vector.load %arg1[%c0, %c0_0] : memref<128x3xf32, #tpu.memory_space<vmem>>, vector<128x3xf32>
    %c0_1 = arith.constant 0 : index
    %c0_2 = arith.constant 0 : index
    %1 = vector.load %arg2[%c0_1, %c0_2] : memref<3x128xf32, #tpu.memory_space<vmem>>, vector<3x128xf32>
    %2 = vector.extract_strided_slice %0 {offsets = [0, 0], sizes = [128, 1], strides = [1, 1]} : vector<128x3xf32> to vector<128x1xf32>
    %3 = vector.extract_strided_slice %1 {offsets = [0, 0], sizes = [1, 128], strides = [1, 1]} : vector<3x128xf32> to vector<1x128xf32>
    %4 = vector.broadcast %2 : vector<128x1xf32> to vector<128x128xf32>
    %5 = vector.broadcast %3 : vector<1x128xf32> to vector<128x128xf32>
    %6 = arith.mulf %4, %5 : vector<128x128xf32>
    %7 = vector.extract_strided_slice %0 {offsets = [0, 1], sizes = [128, 1], strides = [1, 1]} : vector<128x3xf32> to vector<128x1xf32>
    %8 = vector.extract_strided_slice %1 {offsets = [1, 0], sizes = [1, 128], strides = [1, 1]} : vector<3x128xf32> to vector<1x128xf32>
    %9 = vector.broadcast %7 : vector<128x1xf32> to vector<128x128xf32>
    %10 = vector.broadcast %8 : vector<1x128xf32> to vector<128x128xf32>
    %11 = arith.mulf %9, %10 : vector<128x128xf32>
    %12 = arith.addf %6, %11 : vector<128x128xf32>
    %13 = vector.extract_strided_slice %0 {offsets = [0, 2], sizes = [128, 1], strides = [1, 1]} : vector<128x3xf32> to vector<128x1xf32>
    %14 = vector.extract_strided_slice %1 {offsets = [2, 0], sizes = [1, 128], strides = [1, 1]} : vector<3x128xf32> to vector<1x128xf32>
    %15 = vector.broadcast %13 : vector<128x1xf32> to vector<128x128xf32>
    %16 = vector.broadcast %14 : vector<1x128xf32> to vector<128x128xf32>
    %17 = arith.mulf %15, %16 : vector<128x128xf32>
    %18 = arith.addf %12, %17 : vector<128x128xf32>
    %c0_i32 = arith.constant 0 : i32
    %19 = arith.cmpi eq, %arg0, %c0_i32 : i32
    %20 = arith.extui %19 : i1 to i32
    %c0_i32_3 = arith.constant 0 : i32
    %21 = arith.cmpi ne, %20, %c0_i32_3 : i32
    scf.if %21 {
      %cst_13 = arith.constant 0.000000e+00 : f32
      %43 = vector.broadcast %cst_13 : f32 to vector<2x128xf32>
      %c0_14 = arith.constant 0 : index
      %c0_15 = arith.constant 0 : index
      %44 = vector.load %arg3[%c0_14, %c0_15] : memref<2x128xf32, #tpu.memory_space<vmem>>, vector<2x128xf32>
      tpu.vector_store %arg3[%c0_14, %c0_15], %43 {strides = array<i32>} : memref<2x128xf32, #tpu.memory_space<vmem>>, vector<2x128xf32>,
    } else {
    }
    %c128_i32 = arith.constant 128 : i32
    %22 = arith.muli %arg0, %c128_i32 : i32
    %23 = tpu.iota {dimensions = array<i32: 0>} : vector<128x1xi32>
    %24 = vector.broadcast %22 : i32 to vector<128x1xi32>
    %25 = arith.addi %24, %23 : vector<128x1xi32>
    %c300_i32 = arith.constant 300 : i32
    %26 = vector.broadcast %c300_i32 : i32 to vector<128x1xi32>
    %27 = arith.cmpi slt, %25, %26 : vector<128x1xi32>
    %cst = arith.constant 0.000000e+00 : f32
    %28 = vector.shape_cast %27 : vector<128x1xi1> to vector<128x1xi1>
    %29 = vector.broadcast %28 : vector<128x1xi1> to vector<128x128xi1>
    %30 = vector.broadcast %cst : f32 to vector<128x128xf32>
    %31 = arith.select %29, %18, %30 : vector<128x128xi1>, vector<128x128xf32>
    %c0_4 = arith.constant 0 : index
    %c0_5 = arith.constant 0 : index
    %32 = vector.load %arg3[%c0_4, %c0_5] : memref<2x128xf32, #tpu.memory_space<vmem>>, vector<1x128xf32>
    %cst_6 = arith.constant dense<0.000000e+00> : vector<128xf32>
    %33 = vector.multi_reduction <add>, %31, %cst_6 [0] : vector<128x128xf32> to vector<128xf32>
    %34 = vector.shape_cast %33 : vector<128xf32> to vector<1x128xf32>
    %35 = arith.addf %32, %34 : vector<1x128xf32>
    %c0_7 = arith.constant 0 : index
    %c0_8 = arith.constant 0 : index
    %36 = vector.load %arg3[%c0_7, %c0_8] : memref<2x128xf32, #tpu.memory_space<vmem>>, vector<1x128xf32>
    tpu.vector_store %arg3[%c0_7, %c0_8], %35 {strides = array<i32>} : memref<2x128xf32, #tpu.memory_space<vmem>>, vector<1x128xf32>,
    %c1 = arith.constant 1 : index
    %c0_9 = arith.constant 0 : index
    %37 = vector.load %arg3[%c1, %c0_9] : memref<2x128xf32, #tpu.memory_space<vmem>>, vector<1x128xf32>
    %38 = arith.mulf %31, %31 : vector<128x128xf32>
    %cst_10 = arith.constant dense<0.000000e+00> : vector<128xf32>
    %39 = vector.multi_reduction <add>, %38, %cst_10 [0] : vector<128x128xf32> to vector<128xf32>
    %40 = vector.shape_cast %39 : vector<128xf32> to vector<1x128xf32>
    %41 = arith.addf %37, %40 : vector<1x128xf32>
    %c1_11 = arith.constant 1 : index
    %c0_12 = arith.constant 0 : index
    %42 = vector.load %arg3[%c1_11, %c0_12] : memref<2x128xf32, #tpu.memory_space<vmem>>, vector<1x128xf32>
    tpu.vector_store %arg3[%c1_11, %c0_12], %41 {strides = array<i32>} : memref<2x128xf32, #tpu.memory_space<vmem>>, vector<1x128xf32>,
    return
  }
  func.func @transform_0(%arg0: i32) -> (i32, i32) {
    %c0_i32 = arith.constant 0 : i32
    %c0_i32_0 = arith.constant 0 : i32
    return %arg0, %c0_i32 : i32, i32
  }
  func.func @transform_1(%arg0: i32) -> (i32, i32) {
    %c0_i32 = arith.constant 0 : i32
    %c0_i32_0 = arith.constant 0 : i32
    %c0_i32_1 = arith.constant 0 : i32
    return %c0_i32, %c0_i32_0 : i32, i32
  }
  func.func @transform_2(%arg0: i32) -> (i32, i32) {
    %c0_i32 = arith.constant 0 : i32
    %c0_i32_0 = arith.constant 0 : i32
    %c0_i32_1 = arith.constant 0 : i32
    return %c0_i32, %c0_i32_0 : i32, i32
  }
}

</mosaic_0001>

<llo_original>
// kernel: tpu_custom_call.1
$region0: #{tpu_custom_call.1}
  #allocation0 [shape = 'u32[]', space=smem, size = 0x4, offset = 0x4, fixed_abs, tag = 'smem constant byte address 0x4 - core index']
  #allocation1 [shape = 'u32[144,128]{1,0:T(1,128)}', space=vmem, size = 0x12000, scoped, tag = 'internal scratch']
  %s0 = inlined_call_operand.vmem [shape: f32[384,3], index: 0, kind: input, shape index: {}]
  %s1 = inlined_call_operand.vmem [shape: f32[3,128], index: 1, kind: input, shape index: {}]
  %s2 = inlined_call_operand.hbm [shape: f32[2,128], index: 2, kind: output, shape index: {}]
  %s3 = sld [smem:[#allocation0]]
  $region45: #{tpu_custom_call.1} parent=0
    _
  %s5 = ssub.s32 1, %s3
  %s6 = scalar_select 0, %s5, %s3
  $region1: #{tpu_custom_call.1} parent=0
    #allocation2 [shape = 'u8[1024]{0}', space=vmem, size = 0x400, scoped, tag = 'output window, operand 0, single buffered']
    #allocation3 [shape = 's32[2]{0}', space=sflag, size = 0x8, scoped, tag = 'scoped memory for tpu_custom_call.1']
    %7 = vsyncpa [#allocation3], 0
    loop: start=0, step=1, limit=5
    $region2: #{tpu_custom_call.1} parent=1 // loop_pre_header
      _
    $region3: #{tpu_custom_call.1} parent=1 // loop_header
      %s9 = sphi 0, %s13
      %p10 = scmp.ge.s32.totalorder %s9, 5
      %s19 = sphi 0, %s21
      %s22 = sphi 0, %s19
      %s23 = sphi 0, %s22
      %s39 = sphi 0, %s23
      %s43 = sphi 0, %s43
      %s45 = sphi 0, %s43
      %s46 = sphi 0, %s45
      %s60 = sphi 0, %s46
      %s64 = sphi 0, %s64
      %s66 = sphi 0, %s64
      %s67 = sphi 0, %s66
      %s81 = sphi 0, %s67
    $region4: #{tpu_custom_call.1} parent=1 // loop_header_branch
      %12 = sbr.rel (%p10) target = $region8
    $region5: #{tpu_custom_call.1} parent=1 // loop_body
      %s14 = ssub.s32 %s9, 1
      %s15 = ssub.s32 %s9, 2
      %s16 = sadd.s32 %s9, 1
      %s17 = ssub.s32 %s9, %s16
      %p18 = scmp.eq.s32.totalorder %s17, 0
      %s20 = sadd.s32 %s19, 1
      %s21 = scalar_select %p18, %s19, %s20
      %p24 = pneg %p18
      %p25 = scmp.eq.s32.totalorder %s9, 2
      %p26 = por %p24, %p25
      %p27 = scmp.ne.s32.totalorder %s19, %s22
      %p28 = scmp.eq.s32.totalorder %s9, 0
      %p29 = por %p27, %p28
      %p30 = scmp.ne.s32.totalorder %s19, %s22
      %p31 = scmp.eq.s32.totalorder %s14, 2
      %p32 = por %p30, %p31
      %p33 = scmp.ne.s32.totalorder %s22, %s23
      %p34 = scmp.eq.s32.totalorder %s14, 0
      %p35 = por %p33, %p34
      %p36 = scmp.ne.s32.totalorder %s22, %s23
      %p37 = scmp.eq.s32.totalorder %s15, 2
      %p38 = por %p36, %p37
      %p40 = scmp.ne.s32.totalorder %s23, %s39
      %p41 = scmp.eq.s32.totalorder %s15, 0
      %p42 = por %p40, %p41
      %s44 = sadd.s32 %s43, 1
      %p47 = scmp.eq.s32.totalorder %s9, 2
      %p48 = scmp.ne.s32.totalorder %s43, %s45
      %p49 = scmp.eq.s32.totalorder %s9, 0
      %p50 = por %p48, %p49
      %p51 = scmp.ne.s32.totalorder %s43, %s45
      %p52 = scmp.eq.s32.totalorder %s14, 2
      %p53 = por %p51, %p52
      %p54 = scmp.ne.s32.totalorder %s45, %s46
      %p55 = scmp.eq.s32.totalorder %s14, 0
      %p56 = por %p54, %p55
      %p57 = scmp.ne.s32.totalorder %s45, %s46
      %p58 = scmp.eq.s32.totalorder %s15, 2
      %p59 = por %p57, %p58
      %p61 = scmp.ne.s32.totalorder %s46, %s60
      %p62 = scmp.eq.s32.totalorder %s15, 0
      %p63 = por %p61, %p62
      %s65 = sadd.s32 %s64, 1
      %p68 = scmp.eq.s32.totalorder %s9, 2
      %p69 = scmp.ne.s32.totalorder %s64, %s66
      %p70 = scmp.eq.s32.totalorder %s9, 0
      %p71 = por %p69, %p70
      %p72 = scmp.ne.s32.totalorder %s64, %s66
      %p73 = scmp.eq.s32.totalorder %s14, 2
      %p74 = por %p72, %p73
      %p75 = scmp.ne.s32.totalorder %s66, %s67
      %p76 = scmp.eq.s32.totalorder %s14, 0
      %p77 = por %p75, %p76
      %p78 = scmp.ne.s32.totalorder %s66, %s67
      %p79 = scmp.eq.s32.totalorder %s15, 2
      %p80 = por %p78, %p79
      %p82 = scmp.ne.s32.totalorder %s67, %s81
      %p83 = scmp.eq.s32.totalorder %s15, 0
      %p84 = por %p82, %p83
      %p85 = scmp.le.s32.totalorder 1, %s9
      %p86 = scmp.lt.s32.totalorder %s9, 4
      %p87 = pnand %p85, %p86
      %p88 = pneg %p87
      // Predicated region
      $region9: #{tpu_custom_call.1} parent=5 // pred_check
        _
      $region10: #{tpu_custom_call.1} parent=5 // pred_check_branch
        %90 = sbr.rel (%p87) target = $region12
      $region11: #{tpu_custom_call.1} parent=5 // pred_region
        %s91 = ssub.s32 %s9, 1
        // Predicated region
        $region13: #{tpu_custom_call.1} parent=11 // pred_check
          %p92 = pneg %p56
        $region14: #{tpu_custom_call.1} parent=11 // pred_check_branch
          %94 = sbr.rel (%p92) target = $region16
        $region15: #{tpu_custom_call.1} parent=11 // pred_region
          _
        $region16: #{tpu_custom_call.1} parent=11 // pred_fallthru
          _
      $region12: #{tpu_custom_call.1} parent=5 // pred_fallthru
        _
      %p95 = scmp.lt.s32.totalorder %s9, 3
      // Predicated region
      $region17: #{tpu_custom_call.1} parent=5 // pred_check
        %p96 = pneg %p95
      $region18: #{tpu_custom_call.1} parent=5 // pred_check_branch
        %98 = sbr.rel (%p96) target = $region20
      $region19: #{tpu_custom_call.1} parent=5 // pred_region
        // Predicated region
        $region21: #{tpu_custom_call.1} parent=19 // pred_check
          %p99 = pneg %p29
        $region22: #{tpu_custom_call.1} parent=19 // pred_check_branch
          %101 = sbr.rel (%p99) target = $region24
        $region23: #{tpu_custom_call.1} parent=19 // pred_region
          %s102 = smul.u32 16, %s9
          %p103 = scmp.lt.s32.totalorder %s102, 47
          %s104 = scalar_select %p103, %s102, 47
          %s105 = smul.addr %s104, 8
          %s106 = scalar_lea.vmem %s0, %s105
          %s107 = smul.u32 16, %s9
        $region24: #{tpu_custom_call.1} parent=19 // pred_fallthru
          _
      $region20: #{tpu_custom_call.1} parent=5 // pred_fallthru
        _
      %p108 = scmp.le.s32.totalorder 1, %s9
      %p109 = scmp.lt.s32.totalorder %s9, 4
      %p110 = pnand %p108, %p109
      %p111 = pneg %p110
      // Predicated region
      $region25: #{tpu_custom_call.1} parent=5 // pred_check
        _
      $region26: #{tpu_custom_call.1} parent=5 // pred_check_branch
        %113 = sbr.rel (%p110) target = $region28
      $region27: #{tpu_custom_call.1} parent=5 // pred_region
        %s114 = ssub.s32 %s9, 1
        %s115 = smul.u32 16, %s14
        %p116 = scmp.lt.s32.totalorder %s115, 47
        %s117 = scalar_select %p116, %s115, 47
        %s118 = smul.addr %s117, 8
        %s119 = scalar_lea.vmem %s0, %s118
        %p120 = pneg %p35
        %p121 = pneg %p32
        %p122 = pneg %p56
        %p123 = pneg %p53
        %p124 = pneg %p77
        %p125 = pneg %p74
        %s126 = smul.u32 16, %s14
        %p127 = scmp.lt.s32.totalorder %s126, 47
        %s128 = scalar_select %p127, %s126, 47
        %s129 = smul.addr %s128, 8
        %s130 = scalar_lea.vmem %s0, %s129
        %s131 = smul.u32 16, %s14
        %v132 = vld [vmem:[%s130] sm:$0xff]
        %v133 = vld [vmem:[%s130 + $0x8] sm:$0xff]
        %v134 = vld [vmem:[%s130 + $0x10] sm:$0xff]
        %v135 = vld [vmem:[%s130 + $0x18] sm:$0xff]
        %v136 = vld [vmem:[%s130 + $0x20] sm:$0xff]
        %v137 = vld [vmem:[%s130 + $0x28] sm:$0xff]
        %v138 = vld [vmem:[%s130 + $0x30] sm:$0xff]
        %v139 = vld [vmem:[%s130 + $0x38] sm:$0xff]
        %v140 = vld [vmem:[%s130 + $0x40] sm:$0xff]
        %v141 = vld [vmem:[%s130 + $0x48] sm:$0xff]
        %v142 = vld [vmem:[%s130 + $0x50] sm:$0xff]
        %v143 = vld [vmem:[%s130 + $0x58] sm:$0xff]
        %v144 = vld [vmem:[%s130 + $0x60] sm:$0xff]
        %v145 = vld [vmem:[%s130 + $0x68] sm:$0xff]
        %v146 = vld [vmem:[%s130 + $0x70] sm:$0xff]
        %v147 = vld [vmem:[%s130 + $0x78] sm:$0xff]
        %v148 = vld [vmem:[%s1] sm:$0x7]
        %150 = vset.pattern.permute.xlu0 0
        %151 = vperm.xlu0 %150, %v132
        %v152 = vpop.permute.xlu0 %151
        %155 = vset.pattern.permute.xlu0 0
        %156 = vperm.xlu0 %155, %v133
        %v157 = vpop.permute.xlu0 %156
        %160 = vset.pattern.permute.xlu0 0
        %161 = vperm.xlu0 %160, %v134
        %v162 = vpop.permute.xlu0 %161
        %165 = vset.pattern.permute.xlu0 0
        %166 = vperm.xlu0 %165, %v135
        %v167 = vpop.permute.xlu0 %166
        %170 = vset.pattern.permute.xlu0 0
        %171 = vperm.xlu0 %170, %v136
        %v172 = vpop.permute.xlu0 %171
        %175 = vset.pattern.permute.xlu0 0
        %176 = vperm.xlu0 %175, %v137
        %v177 = vpop.permute.xlu0 %176
        %180 = vset.pattern.permute.xlu0 0
        %181 = vperm.xlu0 %180, %v138
        %v182 = vpop.permute.xlu0 %181
        %185 = vset.pattern.permute.xlu0 0
        %186 = vperm.xlu0 %185, %v139
        %v187 = vpop.permute.xlu0 %186
        %190 = vset.pattern.permute.xlu0 0
        %191 = vperm.xlu0 %190, %v140
        %v192 = vpop.permute.xlu0 %191
        %195 = vset.pattern.permute.xlu0 0
        %196 = vperm.xlu0 %195, %v141
        %v197 = vpop.permute.xlu0 %196
        %200 = vset.pattern.permute.xlu0 0
        %201 = vperm.xlu0 %200, %v142
        %v202 = vpop.permute.xlu0 %201
        %205 = vset.pattern.permute.xlu0 0
        %206 = vperm.xlu0 %205, %v143
        %v207 = vpop.permute.xlu0 %206
        %210 = vset.pattern.permute.xlu0 0
        %211 = vperm.xlu0 %210, %v144
        %v212 = vpop.permute.xlu0 %211
        %215 = vset.pattern.permute.xlu0 0
        %216 = vperm.xlu0 %215, %v145
        %v217 = vpop.permute.xlu0 %216
        %220 = vset.pattern.permute.xlu0 0
        %221 = vperm.xlu0 %220, %v146
        %v222 = vpop.permute.xlu0 %221
        %225 = vset.pattern.permute.xlu0 0
        %226 = vperm.xlu0 %225, %v147
        %v227 = vpop.permute.xlu0 %226
        %v229 = vlaneseq
        %v230 = vshrl.u32 %v229, 7
        %v231 = vsub.s32 0, %v230
        %v232 = vrot.slane %v148, %v231
        %v233 = vmul.f32 %v152, %v232
        %v234 = vmul.f32 %v157, %v232
        %v235 = vmul.f32 %v162, %v232
        %v236 = vmul.f32 %v167, %v232
        %v237 = vmul.f32 %v172, %v232
        %v238 = vmul.f32 %v177, %v232
        %v239 = vmul.f32 %v182, %v232
        %v240 = vmul.f32 %v187, %v232
        %v241 = vmul.f32 %v192, %v232
        %v242 = vmul.f32 %v197, %v232
        %v243 = vmul.f32 %v202, %v232
        %v244 = vmul.f32 %v207, %v232
        %v245 = vmul.f32 %v212, %v232
        %v246 = vmul.f32 %v217, %v232
        %v247 = vmul.f32 %v222, %v232
        %v248 = vmul.f32 %v227, %v232
        %249 = vset.pattern.permute.xlu0 1
        %250 = vperm.xlu0 %249, %v132
        %v251 = vpop.permute.xlu0 %250
        %253 = vset.pattern.permute.xlu0 1
        %254 = vperm.xlu0 %253, %v133
        %v255 = vpop.permute.xlu0 %254
        %257 = vset.pattern.permute.xlu0 1
        %258 = vperm.xlu0 %257, %v134
        %v259 = vpop.permute.xlu0 %258
        %261 = vset.pattern.permute.xlu0 1
        %262 = vperm.xlu0 %261, %v135
        %v263 = vpop.permute.xlu0 %262
        %265 = vset.pattern.permute.xlu0 1
        %266 = vperm.xlu0 %265, %v136
        %v267 = vpop.permute.xlu0 %266
        %269 = vset.pattern.permute.xlu0 1
        %270 = vperm.xlu0 %269, %v137
        %v271 = vpop.permute.xlu0 %270
        %273 = vset.pattern.permute.xlu0 1
        %274 = vperm.xlu0 %273, %v138
        %v275 = vpop.permute.xlu0 %274
        %277 = vset.pattern.permute.xlu0 1
        %278 = vperm.xlu0 %277, %v139
        %v279 = vpop.permute.xlu0 %278
        %281 = vset.pattern.permute.xlu0 1
        %282 = vperm.xlu0 %281, %v140
        %v283 = vpop.permute.xlu0 %282
        %285 = vset.pattern.permute.xlu0 1
        %286 = vperm.xlu0 %285, %v141
        %v287 = vpop.permute.xlu0 %286
        %289 = vset.pattern.permute.xlu0 1
        %290 = vperm.xlu0 %289, %v142
        %v291 = vpop.permute.xlu0 %290
        %293 = vset.pattern.permute.xlu0 1
        %294 = vperm.xlu0 %293, %v143
        %v295 = vpop.permute.xlu0 %294
        %297 = vset.pattern.permute.xlu0 1
        %298 = vperm.xlu0 %297, %v144
        %v299 = vpop.permute.xlu0 %298
        %301 = vset.pattern.permute.xlu0 1
        %302 = vperm.xlu0 %301, %v145
        %v303 = vpop.permute.xlu0 %302
        %305 = vset.pattern.permute.xlu0 1
        %306 = vperm.xlu0 %305, %v146
        %v307 = vpop.permute.xlu0 %306
        %309 = vset.pattern.permute.xlu0 1
        %310 = vperm.xlu0 %309, %v147
        %v311 = vpop.permute.xlu0 %310
        %v313 = vlaneseq
        %v314 = vshrl.u32 %v313, 7
        %v315 = vsub.s32 1, %v314
        %v316 = vrot.slane %v148, %v315
        %v317 = vmul.f32 %v251, %v316
        %v318 = vmul.f32 %v255, %v316
        %v319 = vmul.f32 %v259, %v316
        %v320 = vmul.f32 %v263, %v316
        %v321 = vmul.f32 %v267, %v316
        %v322 = vmul.f32 %v271, %v316
        %v323 = vmul.f32 %v275, %v316
        %v324 = vmul.f32 %v279, %v316
        %v325 = vmul.f32 %v283, %v316
        %v326 = vmul.f32 %v287, %v316
        %v327 = vmul.f32 %v291, %v316
        %v328 = vmul.f32 %v295, %v316
        %v329 = vmul.f32 %v299, %v316
        %v330 = vmul.f32 %v303, %v316
        %v331 = vmul.f32 %v307, %v316
        %v332 = vmul.f32 %v311, %v316
        %v333 = vadd.f32 %v233, %v317
        %v334 = vadd.f32 %v234, %v318
        %v335 = vadd.f32 %v235, %v319
        %v336 = vadd.f32 %v236, %v320
        %v337 = vadd.f32 %v237, %v321
        %v338 = vadd.f32 %v238, %v322
        %v339 = vadd.f32 %v239, %v323
        %v340 = vadd.f32 %v240, %v324
        %v341 = vadd.f32 %v241, %v325
        %v342 = vadd.f32 %v242, %v326
        %v343 = vadd.f32 %v243, %v327
        %v344 = vadd.f32 %v244, %v328
        %v345 = vadd.f32 %v245, %v329
        %v346 = vadd.f32 %v246, %v330
        %v347 = vadd.f32 %v247, %v331
        %v348 = vadd.f32 %v248, %v332
        %349 = vset.pattern.permute.xlu0 2
        %350 = vperm.xlu0 %349, %v132
        %v351 = vpop.permute.xlu0 %350
        %353 = vset.pattern.permute.xlu0 2
        %354 = vperm.xlu0 %353, %v133
        %v355 = vpop.permute.xlu0 %354
        %357 = vset.pattern.permute.xlu0 2
        %358 = vperm.xlu0 %357, %v134
        %v359 = vpop.permute.xlu0 %358
        %361 = vset.pattern.permute.xlu0 2
        %362 = vperm.xlu0 %361, %v135
        %v363 = vpop.permute.xlu0 %362
        %365 = vset.pattern.permute.xlu0 2
        %366 = vperm.xlu0 %365, %v136
        %v367 = vpop.permute.xlu0 %366
        %369 = vset.pattern.permute.xlu0 2
        %370 = vperm.xlu0 %369, %v137
        %v371 = vpop.permute.xlu0 %370
        %373 = vset.pattern.permute.xlu0 2
        %374 = vperm.xlu0 %373, %v138
        %v375 = vpop.permute.xlu0 %374
        %377 = vset.pattern.permute.xlu0 2
        %378 = vperm.xlu0 %377, %v139
        %v379 = vpop.permute.xlu0 %378
        %381 = vset.pattern.permute.xlu0 2
        %382 = vperm.xlu0 %381, %v140
        %v383 = vpop.permute.xlu0 %382
        %385 = vset.pattern.permute.xlu0 2
        %386 = vperm.xlu0 %385, %v141
        %v387 = vpop.permute.xlu0 %386
        %389 = vset.pattern.permute.xlu0 2
        %390 = vperm.xlu0 %389, %v142
        %v391 = vpop.permute.xlu0 %390
        %393 = vset.pattern.permute.xlu0 2
        %394 = vperm.xlu0 %393, %v143
        %v395 = vpop.permute.xlu0 %394
        %397 = vset.pattern.permute.xlu0 2
        %398 = vperm.xlu0 %397, %v144
        %v399 = vpop.permute.xlu0 %398
        %401 = vset.pattern.permute.xlu0 2
        %402 = vperm.xlu0 %401, %v145
        %v403 = vpop.permute.xlu0 %402
        %405 = vset.pattern.permute.xlu0 2
        %406 = vperm.xlu0 %405, %v146
        %v407 = vpop.permute.xlu0 %406
        %409 = vset.pattern.permute.xlu0 2
        %410 = vperm.xlu0 %409, %v147
        %v411 = vpop.permute.xlu0 %410
        %v413 = vlaneseq
        %v414 = vshrl.u32 %v413, 7
        %v415 = vsub.s32 2, %v414
        %v416 = vrot.slane %v148, %v415
        %v417 = vmul.f32 %v351, %v416
        %v418 = vmul.f32 %v355, %v416
        %v419 = vmul.f32 %v359, %v416
        %v420 = vmul.f32 %v363, %v416
        %v421 = vmul.f32 %v367, %v416
        %v422 = vmul.f32 %v371, %v416
        %v423 = vmul.f32 %v375, %v416
        %v424 = vmul.f32 %v379, %v416
        %v425 = vmul.f32 %v383, %v416
        %v426 = vmul.f32 %v387, %v416
        %v427 = vmul.f32 %v391, %v416
        %v428 = vmul.f32 %v395, %v416
        %v429 = vmul.f32 %v399, %v416
        %v430 = vmul.f32 %v403, %v416
        %v431 = vmul.f32 %v407, %v416
        %v432 = vmul.f32 %v411, %v416
        %v433 = vadd.f32 %v333, %v417
        %v434 = vadd.f32 %v334, %v418
        %v435 = vadd.f32 %v335, %v419
        %v436 = vadd.f32 %v336, %v420
        %v437 = vadd.f32 %v337, %v421
        %v438 = vadd.f32 %v338, %v422
        %v439 = vadd.f32 %v339, %v423
        %v440 = vadd.f32 %v340, %v424
        %v441 = vadd.f32 %v341, %v425
        %v442 = vadd.f32 %v342, %v426
        %v443 = vadd.f32 %v343, %v427
        %v444 = vadd.f32 %v344, %v428
        %v445 = vadd.f32 %v345, %v429
        %v446 = vadd.f32 %v346, %v430
        %v447 = vadd.f32 %v347, %v431
        %v448 = vadd.f32 %v348, %v432
        %p449 = scmp.eq.s32.totalorder %s14, 0
        // Predicated region
        $region29: #{tpu_custom_call.1} parent=27 // pred_check
          %p450 = pneg %p449
        $region30: #{tpu_custom_call.1} parent=27 // pred_check_branch
          %452 = sbr.rel (%p450) target = $region32
        $region31: #{tpu_custom_call.1} parent=27 // pred_region
          %453 = vst [vmem:[#allocation2] sm:$0x3] 0.0
        $region32: #{tpu_custom_call.1} parent=27 // pred_fallthru
          _
        %s454 = smul.u32 %s14, 128
        %v455 = vlaneseq
        %v456 = vshrl.u32 %v455, 7
        %v457 = vadd.s32 %v456, 8
        %v458 = vadd.s32 %v456, 16
        %v459 = vadd.s32 %v456, 24
        %v460 = vadd.s32 %v456, 32
        %v461 = vadd.s32 %v456, 40
        %v462 = vadd.s32 %v456, 48
        %v463 = vadd.s32 %v456, 56
        %v464 = vadd.s32 %v456, 64
        %v465 = vadd.s32 %v456, 72
        %v466 = vadd.s32 %v456, 80
        %v467 = vadd.s32 %v456, 88
        %v468 = vadd.s32 %v456, 96
        %v469 = vadd.s32 %v456, 104
        %v470 = vadd.s32 %v456, 112
        %v471 = vadd.s32 %v456, 120
        %v472 = vstv %s454
        %v473 = vadd.s32 %v472, %v456
        %v474 = vadd.s32 %v472, %v457
        %v475 = vadd.s32 %v472, %v458
        %v476 = vadd.s32 %v472, %v459
        %v477 = vadd.s32 %v472, %v460
        %v478 = vadd.s32 %v472, %v461
        %v479 = vadd.s32 %v472, %v462
        %v480 = vadd.s32 %v472, %v463
        %v481 = vadd.s32 %v472, %v464
        %v482 = vadd.s32 %v472, %v465
        %v483 = vadd.s32 %v472, %v466
        %v484 = vadd.s32 %v472, %v467
        %v485 = vadd.s32 %v472, %v468
        %v486 = vadd.s32 %v472, %v469
        %v487 = vadd.s32 %v472, %v470
        %v488 = vadd.s32 %v472, %v471
        %vm489 = vcmp.lt.s32.totalorder %v473, 300
        %vm490 = vcmp.lt.s32.totalorder %v474, 300
        %vm491 = vcmp.lt.s32.totalorder %v475, 300
        %vm492 = vcmp.lt.s32.totalorder %v476, 300
        %vm493 = vcmp.lt.s32.totalorder %v477, 300
        %vm494 = vcmp.lt.s32.totalorder %v478, 300
        %vm495 = vcmp.lt.s32.totalorder %v479, 300
        %vm496 = vcmp.lt.s32.totalorder %v480, 300
        %vm497 = vcmp.lt.s32.totalorder %v481, 300
        %vm498 = vcmp.lt.s32.totalorder %v482, 300
        %vm499 = vcmp.lt.s32.totalorder %v483, 300
        %vm500 = vcmp.lt.s32.totalorder %v484, 300
        %vm501 = vcmp.lt.s32.totalorder %v485, 300
        %vm502 = vcmp.lt.s32.totalorder %v486, 300
        %vm503 = vcmp.lt.s32.totalorder %v487, 300
        %vm504 = vcmp.lt.s32.totalorder %v488, 300
        %v505 = vsel %vm489, 1, 0
        %v506 = vsel %vm490, 1, 0
        %v507 = vsel %vm491, 1, 0
        %v508 = vsel %vm492, 1, 0
        %v509 = vsel %vm493, 1, 0
        %v510 = vsel %vm494, 1, 0
        %v511 = vsel %vm495, 1, 0
        %v512 = vsel %vm496, 1, 0
        %v513 = vsel %vm497, 1, 0
        %v514 = vsel %vm498, 1, 0
        %v515 = vsel %vm499, 1, 0
        %v516 = vsel %vm500, 1, 0
        %v517 = vsel %vm501, 1, 0
        %v518 = vsel %vm502, 1, 0
        %v519 = vsel %vm503, 1, 0
        %v520 = vsel %vm504, 1, 0
        %vm521 = vcmp.eq.s32.totalorder %v505, 1
        %vm522 = vcmp.eq.s32.totalorder %v506, 1
        %vm523 = vcmp.eq.s32.totalorder %v507, 1
        %vm524 = vcmp.eq.s32.totalorder %v508, 1
        %vm525 = vcmp.eq.s32.totalorder %v509, 1
        %vm526 = vcmp.eq.s32.totalorder %v510, 1
        %vm527 = vcmp.eq.s32.totalorder %v511, 1
        %vm528 = vcmp.eq.s32.totalorder %v512, 1
        %vm529 = vcmp.eq.s32.totalorder %v513, 1
        %vm530 = vcmp.eq.s32.totalorder %v514, 1
        %vm531 = vcmp.eq.s32.totalorder %v515, 1
        %vm532 = vcmp.eq.s32.totalorder %v516, 1
        %vm533 = vcmp.eq.s32.totalorder %v517, 1
        %vm534 = vcmp.eq.s32.totalorder %v518, 1
        %vm535 = vcmp.eq.s32.totalorder %v519, 1
        %vm536 = vcmp.eq.s32.totalorder %v520, 1
        %v537 = vsel %vm521, %v433, 0.0
        %v538 = vsel %vm522, %v434, 0.0
        %v539 = vsel %vm523, %v435, 0.0
        %v540 = vsel %vm524, %v436, 0.0
        %v541 = vsel %vm525, %v437, 0.0
        %v542 = vsel %vm526, %v438, 0.0
        %v543 = vsel %vm527, %v439, 0.0
        %v544 = vsel %vm528, %v440, 0.0
        %v545 = vsel %vm529, %v441, 0.0
        %v546 = vsel %vm530, %v442, 0.0
        %v547 = vsel %vm531, %v443, 0.0
        %v548 = vsel %vm532, %v444, 0.0
        %v549 = vsel %vm533, %v445, 0.0
        %v550 = vsel %vm534, %v446, 0.0
        %v551 = vsel %vm535, %v447, 0.0
        %v552 = vsel %vm536, %v448, 0.0
        %v553 = vld [vmem:[#allocation2] sm:$0x1]
        %v554 = vadd.f32 %v537, %v538
        %v555 = vadd.f32 %v554, %v539
        %v556 = vadd.f32 %v555, %v540
        %v557 = vadd.f32 %v556, %v541
        %v558 = vadd.f32 %v557, %v542
        %v559 = vadd.f32 %v558, %v543
        %v560 = vadd.f32 %v559, %v544
        %v561 = vadd.f32 %v560, %v545
        %v562 = vadd.f32 %v561, %v546
        %v563 = vadd.f32 %v562, %v547
        %v564 = vadd.f32 %v563, %v548
        %v565 = vadd.f32 %v564, %v549
        %v566 = vadd.f32 %v565, %v550
        %v567 = vadd.f32 %v566, %v551
        %v568 = vadd.f32 %v567, %v552
        %v569 = vrot.slane %v568, 4
        %v570 = vadd.f32 %v568, %v569
        %v571 = vrot.slane %v570, 2
        %v572 = vadd.f32 %v570, %v571
        %v573 = vrot.slane %v572, 1
        %v574 = vadd.f32 %v572, %v573
        %v575 = vadd.f32 %v553, %v574
        %576 = vst [vmem:[#allocation2] sm:$0x1] %v575
        %v577 = vld [vmem:[#allocation2 + $0x1] sm:$0x1]
        %v578 = vmul.f32 %v537, %v537
        %v579 = vmul.f32 %v538, %v538
        %v580 = vmul.f32 %v539, %v539
        %v581 = vmul.f32 %v540, %v540
        %v582 = vmul.f32 %v541, %v541
        %v583 = vmul.f32 %v542, %v542
        %v584 = vmul.f32 %v543, %v543
        %v585 = vmul.f32 %v544, %v544
        %v586 = vmul.f32 %v545, %v545
        %v587 = vmul.f32 %v546, %v546
        %v588 = vmul.f32 %v547, %v547
        %v589 = vmul.f32 %v548, %v548
        %v590 = vmul.f32 %v549, %v549
        %v591 = vmul.f32 %v550, %v550
        %v592 = vmul.f32 %v551, %v551
        %v593 = vmul.f32 %v552, %v552
        %v594 = vadd.f32 %v578, %v579
        %v595 = vadd.f32 %v594, %v580
        %v596 = vadd.f32 %v595, %v581
        %v597 = vadd.f32 %v596, %v582
        %v598 = vadd.f32 %v597, %v583
        %v599 = vadd.f32 %v598, %v584
        %v600 = vadd.f32 %v599, %v585
        %v601 = vadd.f32 %v600, %v586
        %v602 = vadd.f32 %v601, %v587
        %v603 = vadd.f32 %v602, %v588
        %v604 = vadd.f32 %v603, %v589
        %v605 = vadd.f32 %v604, %v590
        %v606 = vadd.f32 %v605, %v591
        %v607 = vadd.f32 %v606, %v592
        %v608 = vadd.f32 %v607, %v593
        %v609 = vrot.slane %v608, 4
        %v610 = vadd.f32 %v608, %v609
        %v611 = vrot.slane %v610, 2
        %v612 = vadd.f32 %v610, %v611
        %v613 = vrot.slane %v612, 1
        %v614 = vadd.f32 %v612, %v613
        %v615 = vadd.f32 %v577, %v614
        %616 = vst [vmem:[#allocation2 + $0x1] sm:$0x1] %v615
        // Predicated region
        $region33: #{tpu_custom_call.1} parent=27 // pred_check
          %p617 = pneg %p74
        $region34: #{tpu_custom_call.1} parent=27 // pred_check_branch
          %619 = sbr.rel (%p617) target = $region36
        $region35: #{tpu_custom_call.1} parent=27 // pred_region
          %s621 = ssub.s32 32, 32
          %622 = vsyncadd [#allocation3], %s621
          %s624 = sshll.u32 [#allocation2], 4
          %s625 = int_to_ptr.vmem [resolvable:$true] %s624
          %627 = dma.vmem_to_hbm [thread:$0]  %s625, 32, %s2, [#allocation3]
        $region36: #{tpu_custom_call.1} parent=27 // pred_fallthru
          _
        // Predicated region
        $region37: #{tpu_custom_call.1} parent=27 // pred_check
          %p628 = pneg %p74
        $region38: #{tpu_custom_call.1} parent=27 // pred_check_branch
          %630 = sbr.rel (%p628) target = $region40
        $region39: #{tpu_custom_call.1} parent=27 // pred_region
          %631 = dma.done [#allocation3], 32
        $region40: #{tpu_custom_call.1} parent=27 // pred_fallthru
          _
      $region28: #{tpu_custom_call.1} parent=5 // pred_fallthru
        _
      %p632 = scmp.le.s32.totalorder 2, %s9
      // Predicated region
      $region41: #{tpu_custom_call.1} parent=5 // pred_check
        %p633 = pneg %p632
      $region42: #{tpu_custom_call.1} parent=5 // pred_check_branch
        %635 = sbr.rel (%p633) target = $region44
      $region43: #{tpu_custom_call.1} parent=5 // pred_region
        %s636 = ssub.s32 %s9, 2
      $region44: #{tpu_custom_call.1} parent=5 // pred_fallthru
        _
    $region6: #{tpu_custom_call.1} parent=1 // loop_footer
      %s13 = sadd.s32 1, %s9
    $region7: #{tpu_custom_call.1} parent=1 // loop_footer_branch
      %8 = sbr.rel target = $region3
    $region8: #{tpu_custom_call.1} parent=1 // loop_exit
      _
    %637 = vsyncpa [#allocation3], 1
    %s638 = scalar_lea.sflag [#allocation3], 1
    %639 = vsyncpa %s638, 1

</llo_original>
